<compile_context>
chip_gen: v7x
topology: tpu7x:2x2x1
jax: 0.10.0
libtpu: 0.0.40
codegen_flags: <defaults>
</compile_context>

<pallas_src>
import jax
import jax.numpy as jnp
from jax.experimental import pallas as pl
from jax.experimental.pallas import tpu as pltpu


def rnn_kernel(xp_ref, h0_ref, whh_ref, why_ref, bhy_ref, out_ref):
    """Single-invocation kernel.

    xp_ref : (T, B, H)  precomputed input projection + combined bias, time-major
    h0_ref : (1, H)     learned initial hidden state
    whh_ref: (H, H)     W_hh^T
    why_ref: (H, V)     W_hy^T
    bhy_ref: (1, V)     b_hy
    out_ref: (T*B, V)   logits, time-major flattened
    """
    T, B, H = xp_ref.shape

    # Broadcast the learned initial hidden state to every batch row
    # (mirrors `for i in range(batch_size): hiddens[i] = self.h`).
    h = jnp.broadcast_to(h0_ref[...], (B, H))

    whh = whh_ref[...]

    # Statically unrolled serial recurrence (T is tiny); hidden state stays in
    # vregs, only the recurrent matmul + tanh are on the serial critical path.
    hs = []
    for t in range(T):
        pre = jnp.dot(h, whh, preferred_element_type=jnp.float32) + xp_ref[t]
        h = jnp.tanh(pre)
        hs.append(h)

    # Batched output projection: one (T*B, H) @ (H, V) matmul + bias, and a
    # single store of the whole logits slab.
    hs_all = jnp.concatenate(hs, axis=0)                      # (T*B, H)
    out_ref[...] = (jnp.dot(hs_all, why_ref[...],
                            preferred_element_type=jnp.float32)
                    + bhy_ref[...])


def rnn_forward(tokens, params):
    """tokens: (B, S) int32.  Returns (B, S-1, V) float32 logits."""
    emb = params["embeddings"]          # (V, E)
    B, S = tokens.shape
    V, E = emb.shape
    H = params["h0"].shape[-1]
    T = S - 1

    # Glue: embedding gather + x[:, i] + x[:, 0], time-major.
    x_emb = jnp.take(emb, tokens, axis=0)                     # (B, S, E)
    xe = x_emb[:, :T, :] + x_emb[:, 0:1, :]                   # (B, T, E)
    xe = jnp.transpose(xe, (1, 0, 2)).astype(jnp.float32)     # (T, B, E)

    # Hoisted non-recurrent projection: one batched matmul for all timesteps,
    # with the two bias vectors folded into one.
    b_comb = params["bxh"] + params["bhh"]                    # (1, H)
    xp = (xe.reshape(T * B, E) @ params["wxh_t"] + b_comb).reshape(T, B, H)
    xp = xp.astype(jnp.float32)

    out_flat = pl.pallas_call(
        rnn_kernel,
        out_shape=jax.ShapeDtypeStruct((T * B, V), jnp.float32),
        grid_spec=pltpu.PrefetchScalarGridSpec(
            num_scalar_prefetch=0,
            grid=(1,),
            in_specs=[
                pl.BlockSpec((T, B, H), lambda i: (0, 0, 0)),  # xp (full)
                pl.BlockSpec((1, H), lambda i: (0, 0)),        # h0
                pl.BlockSpec((H, H), lambda i: (0, 0)),        # W_hh^T
                pl.BlockSpec((H, V), lambda i: (0, 0)),        # W_hy^T
                pl.BlockSpec((1, V), lambda i: (0, 0)),        # b_hy
            ],
            out_specs=pl.BlockSpec((T * B, V), lambda i: (0, 0)),
        ),
        compiler_params=pltpu.CompilerParams(
            dimension_semantics=("arbitrary",)),   # sequential recurrence inside
    )(
        xp,
        params["h0"],
        params["whh_t"],
        params["why_t"],
        params["bhy"],
    )

    # (T*B, V) time-major -> (B, T, V) to match PyTorch output layout.
    return jnp.transpose(out_flat.reshape(T, B, V), (1, 0, 2))


def rnn_forward_ref(tokens, params):
    """Pure-JAX reference reproducing the PyTorch loop exactly."""
    emb = params["embeddings"]
    B, S = tokens.shape
    x = jnp.take(emb, tokens, axis=0)                         # (B, S, E)
    h = jnp.broadcast_to(params["h0"], (B, params["h0"].shape[-1]))
    outs = []
    for i in range(S - 1):
        h = jnp.tanh(h @ params["whh_t"] + params["bhh"]
                     + (x[:, i] + x[:, 0]) @ params["wxh_t"] + params["bxh"])
        outs.append(h @ params["why_t"] + params["bhy"])
    return jnp.stack(outs, axis=1)


def init_params(key, vocab_size, embed_dim, hidden_dim):
    ks = jax.random.split(key, 8)
    # Linear weights stored pre-transposed (in_features, out_features) so all
    # matmuls are plain row-major:  y = x @ W^T + b.
    return {
        "whh_t": jax.random.normal(ks[0], (hidden_dim, hidden_dim), jnp.float32) * 0.1,
        "bhh":   jax.random.normal(ks[1], (1, hidden_dim), jnp.float32) * 0.1,
        "wxh_t": jax.random.normal(ks[2], (embed_dim, hidden_dim), jnp.float32) * 0.1,
        "bxh":   jax.random.normal(ks[3], (1, hidden_dim), jnp.float32) * 0.1,
        "why_t": jax.random.normal(ks[4], (hidden_dim, vocab_size), jnp.float32) * 0.1,
        "bhy":   jax.random.normal(ks[5], (1, vocab_size), jnp.float32) * 0.1,
        "h0":    jax.random.normal(ks[6], (1, hidden_dim), jnp.float32),
        "embeddings": jax.random.normal(ks[7], (vocab_size, embed_dim), jnp.float32),
    }


if __name__ == "__main__":
    VOCAB, EMBED, HIDDEN = 16, 8, 32
    B, S = 2, 8

    key = jax.random.PRNGKey(0)
    kp, kt = jax.random.split(key)
    params = init_params(kp, VOCAB, EMBED, HIDDEN)
    tokens = jax.random.randint(kt, (B, S), 0, VOCAB, dtype=jnp.int32)

    out = jax.jit(rnn_forward)(tokens, params)
    out = jax.block_until_ready(out)

    ref = rnn_forward_ref(tokens, params)
    assert out.shape == (B, S - 1, VOCAB), out.shape
    assert jnp.allclose(out, ref, atol=1e-5, rtol=1e-5), "mismatch vs reference"

    print("KERNEL_OK")
</pallas_src>

<mosaic_0001>
module attributes {stable_mosaic.version = 11 : i64} {
  func.func @rnn_kernel(%arg0: i32, %arg1: memref<7x2x32xf32, #tpu.memory_space<vmem>>, %arg2: memref<1x32xf32, #tpu.memory_space<vmem>>, %arg3: memref<32x32xf32, #tpu.memory_space<vmem>>, %arg4: memref<32x16xf32, #tpu.memory_space<vmem>>, %arg5: memref<1x16xf32, #tpu.memory_space<vmem>>, %arg6: memref<14x16xf32, #tpu.memory_space<vmem>>) attributes {dimension_semantics = [#tpu.dimension_semantics<arbitrary>], iteration_bounds = array<i64: 1>, scalar_prefetch = 0 : i64, scratch_operands = 0 : i64, tpu.core_type = #tpu.core_type<tc>, window_params = [{pipeline_mode = #tpu.pipeline_mode<synchronous>, transform_indices = @transform_0, window_bounds = array<i64: 7, 2, 32>}, {pipeline_mode = #tpu.pipeline_mode<synchronous>, transform_indices = @transform_1, window_bounds = array<i64: 1, 32>}, {pipeline_mode = #tpu.pipeline_mode<synchronous>, transform_indices = @transform_2, window_bounds = array<i64: 32, 32>}, {pipeline_mode = #tpu.pipeline_mode<synchronous>, transform_indices = @transform_3, window_bounds = array<i64: 32, 16>}, {pipeline_mode = #tpu.pipeline_mode<synchronous>, transform_indices = @transform_4, window_bounds = array<i64: 1, 16>}, {pipeline_mode = #tpu.pipeline_mode<synchronous>, transform_indices = @transform_5, window_bounds = array<i64: 14, 16>}]} {
    %c0 = arith.constant 0 : index
    %c0_0 = arith.constant 0 : index
    %0 = vector.load %arg2[%c0, %c0_0] : memref<1x32xf32, #tpu.memory_space<vmem>>, vector<1x32xf32>
    %1 = vector.shape_cast %0 : vector<1x32xf32> to vector<1x32xf32>
    %2 = vector.broadcast %1 : vector<1x32xf32> to vector<2x32xf32>
    %c0_1 = arith.constant 0 : index
    %c0_2 = arith.constant 0 : index
    %3 = vector.load %arg3[%c0_1, %c0_2] : memref<32x32xf32, #tpu.memory_space<vmem>>, vector<32x32xf32>
    %cst = arith.constant dense<0.000000e+00> : vector<2x32xf32>
    %4 = tpu.matmul %2, %3, %cst {dimension_numbers = #tpu.dot_dimension_numbers<[1], [0], [0], [1], [0, 0, 1, 1], [], []>} : vector<2x32xf32>, vector<32x32xf32>, vector<2x32xf32> -> vector<2x32xf32>
    %c0_3 = arith.constant 0 : index
    %c0_4 = arith.constant 0 : index
    %c0_5 = arith.constant 0 : index
    %5 = vector.load %arg1[%c0_3, %c0_4, %c0_5] : memref<7x2x32xf32, #tpu.memory_space<vmem>>, vector<1x2x32xf32>
    %6 = vector.shape_cast %5 : vector<1x2x32xf32> to vector<2x32xf32>
    %7 = arith.addf %4, %6 : vector<2x32xf32>
    %8 = math.tanh %7 : vector<2x32xf32>
    %cst_6 = arith.constant dense<0.000000e+00> : vector<2x32xf32>
    %9 = tpu.matmul %8, %3, %cst_6 {dimension_numbers = #tpu.dot_dimension_numbers<[1], [0], [0], [1], [0, 0, 1, 1], [], []>} : vector<2x32xf32>, vector<32x32xf32>, vector<2x32xf32> -> vector<2x32xf32>
    %c1 = arith.constant 1 : index
    %c0_7 = arith.constant 0 : index
    %c0_8 = arith.constant 0 : index
    %10 = vector.load %arg1[%c1, %c0_7, %c0_8] : memref<7x2x32xf32, #tpu.memory_space<vmem>>, vector<1x2x32xf32>
    %11 = vector.shape_cast %10 : vector<1x2x32xf32> to vector<2x32xf32>
    %12 = arith.addf %9, %11 : vector<2x32xf32>
    %13 = math.tanh %12 : vector<2x32xf32>
    %cst_9 = arith.constant dense<0.000000e+00> : vector<2x32xf32>
    %14 = tpu.matmul %13, %3, %cst_9 {dimension_numbers = #tpu.dot_dimension_numbers<[1], [0], [0], [1], [0, 0, 1, 1], [], []>} : vector<2x32xf32>, vector<32x32xf32>, vector<2x32xf32> -> vector<2x32xf32>
    %c2 = arith.constant 2 : index
    %c0_10 = arith.constant 0 : index
    %c0_11 = arith.constant 0 : index
    %15 = vector.load %arg1[%c2, %c0_10, %c0_11] : memref<7x2x32xf32, #tpu.memory_space<vmem>>, vector<1x2x32xf32>
    %16 = vector.shape_cast %15 : vector<1x2x32xf32> to vector<2x32xf32>
    %17 = arith.addf %14, %16 : vector<2x32xf32>
    %18 = math.tanh %17 : vector<2x32xf32>
    %cst_12 = arith.constant dense<0.000000e+00> : vector<2x32xf32>
    %19 = tpu.matmul %18, %3, %cst_12 {dimension_numbers = #tpu.dot_dimension_numbers<[1], [0], [0], [1], [0, 0, 1, 1], [], []>} : vector<2x32xf32>, vector<32x32xf32>, vector<2x32xf32> -> vector<2x32xf32>
    %c3 = arith.constant 3 : index
    %c0_13 = arith.constant 0 : index
    %c0_14 = arith.constant 0 : index
    %20 = vector.load %arg1[%c3, %c0_13, %c0_14] : memref<7x2x32xf32, #tpu.memory_space<vmem>>, vector<1x2x32xf32>
    %21 = vector.shape_cast %20 : vector<1x2x32xf32> to vector<2x32xf32>
    %22 = arith.addf %19, %21 : vector<2x32xf32>
    %23 = math.tanh %22 : vector<2x32xf32>
    %cst_15 = arith.constant dense<0.000000e+00> : vector<2x32xf32>
    %24 = tpu.matmul %23, %3, %cst_15 {dimension_numbers = #tpu.dot_dimension_numbers<[1], [0], [0], [1], [0, 0, 1, 1], [], []>} : vector<2x32xf32>, vector<32x32xf32>, vector<2x32xf32> -> vector<2x32xf32>
    %c4 = arith.constant 4 : index
    %c0_16 = arith.constant 0 : index
    %c0_17 = arith.constant 0 : index
    %25 = vector.load %arg1[%c4, %c0_16, %c0_17] : memref<7x2x32xf32, #tpu.memory_space<vmem>>, vector<1x2x32xf32>
    %26 = vector.shape_cast %25 : vector<1x2x32xf32> to vector<2x32xf32>
    %27 = arith.addf %24, %26 : vector<2x32xf32>
    %28 = math.tanh %27 : vector<2x32xf32>
    %cst_18 = arith.constant dense<0.000000e+00> : vector<2x32xf32>
    %29 = tpu.matmul %28, %3, %cst_18 {dimension_numbers = #tpu.dot_dimension_numbers<[1], [0], [0], [1], [0, 0, 1, 1], [], []>} : vector<2x32xf32>, vector<32x32xf32>, vector<2x32xf32> -> vector<2x32xf32>
    %c5 = arith.constant 5 : index
    %c0_19 = arith.constant 0 : index
    %c0_20 = arith.constant 0 : index
    %30 = vector.load %arg1[%c5, %c0_19, %c0_20] : memref<7x2x32xf32, #tpu.memory_space<vmem>>, vector<1x2x32xf32>
    %31 = vector.shape_cast %30 : vector<1x2x32xf32> to vector<2x32xf32>
    %32 = arith.addf %29, %31 : vector<2x32xf32>
    %33 = math.tanh %32 : vector<2x32xf32>
    %cst_21 = arith.constant dense<0.000000e+00> : vector<2x32xf32>
    %34 = tpu.matmul %33, %3, %cst_21 {dimension_numbers = #tpu.dot_dimension_numbers<[1], [0], [0], [1], [0, 0, 1, 1], [], []>} : vector<2x32xf32>, vector<32x32xf32>, vector<2x32xf32> -> vector<2x32xf32>
    %c6 = arith.constant 6 : index
    %c0_22 = arith.constant 0 : index
    %c0_23 = arith.constant 0 : index
    %35 = vector.load %arg1[%c6, %c0_22, %c0_23] : memref<7x2x32xf32, #tpu.memory_space<vmem>>, vector<1x2x32xf32>
    %36 = vector.shape_cast %35 : vector<1x2x32xf32> to vector<2x32xf32>
    %37 = arith.addf %34, %36 : vector<2x32xf32>
    %38 = math.tanh %37 : vector<2x32xf32>
    %39 = tpu.concatenate %8, %13, %18, %23, %28, %33, %38 in 0 : vector<2x32xf32>, vector<2x32xf32>, vector<2x32xf32>, vector<2x32xf32>, vector<2x32xf32>, vector<2x32xf32>, vector<2x32xf32> -> vector<14x32xf32>
    %c0_24 = arith.constant 0 : index
    %c0_25 = arith.constant 0 : index
    %40 = vector.load %arg4[%c0_24, %c0_25] : memref<32x16xf32, #tpu.memory_space<vmem>>, vector<32x16xf32>
    %cst_26 = arith.constant dense<0.000000e+00> : vector<14x16xf32>
    %41 = tpu.matmul %39, %40, %cst_26 {dimension_numbers = #tpu.dot_dimension_numbers<[1], [0], [0], [1], [0, 0, 1, 1], [], []>} : vector<14x32xf32>, vector<32x16xf32>, vector<14x16xf32> -> vector<14x16xf32>
    %c0_27 = arith.constant 0 : index
    %c0_28 = arith.constant 0 : index
    %42 = vector.load %arg5[%c0_27, %c0_28] : memref<1x16xf32, #tpu.memory_space<vmem>>, vector<1x16xf32>
    %43 = vector.broadcast %42 : vector<1x16xf32> to vector<14x16xf32>
    %44 = arith.addf %41, %43 : vector<14x16xf32>
    %c0_29 = arith.constant 0 : index
    %c0_30 = arith.constant 0 : index
    %45 = vector.load %arg6[%c0_29, %c0_30] : memref<14x16xf32, #tpu.memory_space<vmem>>, vector<14x16xf32>
    tpu.vector_store %arg6[%c0_29, %c0_30], %44 {strides = array<i32>} : memref<14x16xf32, #tpu.memory_space<vmem>>, vector<14x16xf32>,
    return
  }
  func.func @transform_0(%arg0: i32) -> (i32, i32, i32) {
    %c0_i32 = arith.constant 0 : i32
    %c0_i32_0 = arith.constant 0 : i32
    %c0_i32_1 = arith.constant 0 : i32
    %c0_i32_2 = arith.constant 0 : i32
    return %c0_i32, %c0_i32_0, %c0_i32_1 : i32, i32, i32
  }
  func.func @transform_1(%arg0: i32) -> (i32, i32) {
    %c0_i32 = arith.constant 0 : i32
    %c0_i32_0 = arith.constant 0 : i32
    %c0_i32_1 = arith.constant 0 : i32
    return %c0_i32, %c0_i32_0 : i32, i32
  }
  func.func @transform_2(%arg0: i32) -> (i32, i32) {
    %c0_i32 = arith.constant 0 : i32
    %c0_i32_0 = arith.constant 0 : i32
    %c0_i32_1 = arith.constant 0 : i32
    return %c0_i32, %c0_i32_0 : i32, i32
  }
  func.func @transform_3(%arg0: i32) -> (i32, i32) {
    %c0_i32 = arith.constant 0 : i32
    %c0_i32_0 = arith.constant 0 : i32
    %c0_i32_1 = arith.constant 0 : i32
    return %c0_i32, %c0_i32_0 : i32, i32
  }
  func.func @transform_4(%arg0: i32) -> (i32, i32) {
    %c0_i32 = arith.constant 0 : i32
    %c0_i32_0 = arith.constant 0 : i32
    %c0_i32_1 = arith.constant 0 : i32
    return %c0_i32, %c0_i32_0 : i32, i32
  }
  func.func @transform_5(%arg0: i32) -> (i32, i32) {
    %c0_i32 = arith.constant 0 : i32
    %c0_i32_0 = arith.constant 0 : i32
    %c0_i32_1 = arith.constant 0 : i32
    return %c0_i32, %c0_i32_0 : i32, i32
  }
}

</mosaic_0001>

<llo_original>
// kernel: rnn_forward.1
$region0: #{rnn_forward.1}
  #allocation0 [shape = 'u32[]', space=smem, size = 0x4, offset = 0x4, fixed_abs, tag = 'smem constant byte address 0x4 - core index']
  #allocation1 [shape = 'u32[144,128]{1,0:T(1,128)}', space=vmem, size = 0x12000, scoped, tag = 'internal scratch']
  %s0 = inlined_call_operand.vmem [shape: f32[7,2,32], index: 0, kind: input, shape index: {}]
  %s1 = inlined_call_operand.vmem [shape: f32[1,32], index: 1, kind: input, shape index: {}]
  %s2 = inlined_call_operand.vmem [shape: f32[32,32], index: 2, kind: input, shape index: {}]
  %s3 = inlined_call_operand.vmem [shape: f32[32,16], index: 3, kind: input, shape index: {}]
  %s4 = inlined_call_operand.vmem [shape: f32[1,16], index: 4, kind: input, shape index: {}]
  %s5 = inlined_call_operand.vmem [shape: f32[14,16], index: 5, kind: output, shape index: {}]
  %s6 = sld [smem:[#allocation0]]
  $region30: #{rnn_forward.1} parent=0
    _
  %s8 = ssub.s32 1, %s6
  %s9 = scalar_select 0, %s8, %s6
  // Predicated region
  $region2: #{rnn_forward.1} parent=0 // pred_check
    _
  $region3: #{rnn_forward.1} parent=0 // pred_check_branch
    %11 = sbr.rel (0) target = $region5
  $region4: #{rnn_forward.1} parent=0 // pred_region
    _
  $region5: #{rnn_forward.1} parent=0 // pred_fallthru
    _
  // Predicated region
  $region6: #{rnn_forward.1} parent=0 // pred_check
    _
  $region7: #{rnn_forward.1} parent=0 // pred_check_branch
    %13 = sbr.rel (0) target = $region9
  $region8: #{rnn_forward.1} parent=0 // pred_region
    _
  $region9: #{rnn_forward.1} parent=0 // pred_fallthru
    _
  // Predicated region
  $region10: #{rnn_forward.1} parent=0 // pred_check
    _
  $region11: #{rnn_forward.1} parent=0 // pred_check_branch
    %15 = sbr.rel (0) target = $region13
  $region12: #{rnn_forward.1} parent=0 // pred_region
    _
  $region13: #{rnn_forward.1} parent=0 // pred_fallthru
    _
  // Predicated region
  $region14: #{rnn_forward.1} parent=0 // pred_check
    _
  $region15: #{rnn_forward.1} parent=0 // pred_check_branch
    %17 = sbr.rel (0) target = $region17
  $region16: #{rnn_forward.1} parent=0 // pred_region
    _
  $region17: #{rnn_forward.1} parent=0 // pred_fallthru
    _
  // Predicated region
  $region18: #{rnn_forward.1} parent=0 // pred_check
    _
  $region19: #{rnn_forward.1} parent=0 // pred_check_branch
    %19 = sbr.rel (0) target = $region21
  $region20: #{rnn_forward.1} parent=0 // pred_region
    _
  $region21: #{rnn_forward.1} parent=0 // pred_fallthru
    _
  %v20 = vld [vmem:[%s1] sm:$0x1]
  %v22 = vlaneseq
  %v23 = vshrl.u32 %v22, 7
  %v24 = vsub.s32 0, %v23
  %v25 = vrot.slane %v20, %v24
  %v26 = vld [vmem:[%s2] sm:$0xff]
  %v27 = vld [vmem:[%s2 + $0x8] sm:$0xff]
  %v28 = vld [vmem:[%s2 + $0x10] sm:$0xff]
  %v29 = vld [vmem:[%s2 + $0x18] sm:$0xff]
  %v30 = vld [vmem:[%s0] sm:$0x3]
  %vm31 = vcmask 261120
  %v32 = vsel %vm31, %v25, 0
  %34 = vmatprep.subr.mxu0 0.0
  %35 = vmatpush1.msra.mxu0 %v26
  %36 = vmatprep.subr.mxu0 0.0
  %37 = vmatpush1.msra.mxu0 %v27
  %38 = vmatprep.subr.mxu0 0.0
  %39 = vmatpush1.msra.mxu0 %v28
  %40 = vmatprep.subr.mxu0 0.0
  %41 = vmatpush1.msra.mxu0 %v29
  %42 = vmatprep.subr.mxu0 0.0
  %43 = vmatpush1.msra.mxu0 0.0
  %44 = vmatprep.subr.mxu0 0.0
  %45 = vmatpush1.msra.mxu0 0.0
  %46 = vmatprep.subr.mxu0 0.0
  %47 = vmatpush1.msra.mxu0 0.0
  %48 = vmatprep.subr.mxu0 0.0
  %49 = vmatpush1.msra.mxu0 0.0
  %50 = vmatprep.subr.mxu0 0.0
  %51 = vmatpush1.msra.mxu0 0.0
  %52 = vmatprep.subr.mxu0 0.0
  %53 = vmatpush1.msra.mxu0 0.0
  %54 = vmatprep.subr.mxu0 0.0
  %55 = vmatpush1.msra.mxu0 0.0
  %56 = vmatprep.subr.mxu0 0.0
  %57 = vmatpush1.msra.mxu0 0.0
  %58 = vmatprep.subr.mxu0 0.0
  %59 = vmatpush1.msra.mxu0 0.0
  %60 = vmatprep.subr.mxu0 0.0
  %61 = vmatpush1.msra.mxu0 0.0
  %62 = vmatprep.subr.mxu0 0.0
  %63 = vmatpush1.msra.mxu0 0.0
  %64 = vmatprep.subr.mxu0 0.0
  %65 = vmatpush1.msra.mxu0 0.0
  %66 = vmatprep.subr.mxu0 0.0
  %67 = vmatpush1.msra.mxu0 0.0
  %68 = vmatprep.subr.mxu0 0.0
  %69 = vmatpush1.msra.mxu0 0.0
  %70 = vmatprep.subr.mxu0 0.0
  %71 = vmatpush1.msra.mxu0 0.0
  %72 = vmatprep.subr.mxu0 0.0
  %73 = vmatpush1.msra.mxu0 0.0
  %74 = vmatprep.subr.mxu0 0.0
  %75 = vmatpush1.msra.mxu0 0.0
  %76 = vmatprep.subr.mxu0 0.0
  %77 = vmatpush1.msra.mxu0 0.0
  %78 = vmatprep.subr.mxu0 0.0
  %79 = vmatpush1.msra.mxu0 0.0
  %80 = vmatprep.subr.mxu0 0.0
  %81 = vmatpush1.msra.mxu0 0.0
  %82 = vmatprep.subr.mxu0 0.0
  %83 = vmatpush1.msra.mxu0 0.0
  %84 = vmatprep.subr.mxu0 0.0
  %85 = vmatpush1.msra.mxu0 0.0
  %86 = vmatprep.subr.mxu0 0.0
  %87 = vmatpush1.msra.mxu0 0.0
  %88 = vmatprep.subr.mxu0 0.0
  %89 = vmatpush1.msra.mxu0 0.0
  %90 = vmatprep.subr.mxu0 0.0
  %91 = vmatpush1.msra.mxu0 0.0
  %92 = vmatprep.subr.mxu0 0.0
  %93 = vmatpush1.msra.mxu0 0.0
  %94 = vmatprep.subr.mxu0 0.0
  %95 = vmatpush1.msra.mxu0 0.0
  %96 = vmatprep.subr.mxu0 0.0
  %97 = vmatpush1.msra.mxu0 0.0
  %98 = vmatprep.mubr.f32.mxu0 0.0
  %99 = vmatmul.mubr.f32.gmra.mrb[0].mxu0 %v32
  %v100 = vpop.f32.mrb[0].mxu0
  %v101 = vadd.f32 %v30, %v100
  %v102 = vpop.f32.mrb[0].mxu0
  %103 = vdwg.mxu0
  %v104 = vtanh.pop %v101
  %s105 = scalar_lea.vmem %s0, 2
  %v106 = vld [vmem:[%s105] sm:$0x3]
  %v108 = vsel %vm31, %v104, 0
  %110 = vmatprep.subr.mxu0 0.0
  %111 = vmatpush1.msra.mxu0 %v26
  %112 = vmatprep.subr.mxu0 0.0
  %113 = vmatpush1.msra.mxu0 %v27
  %114 = vmatprep.subr.mxu0 0.0
  %115 = vmatpush1.msra.mxu0 %v28
  %116 = vmatprep.subr.mxu0 0.0
  %117 = vmatpush1.msra.mxu0 %v29
  %118 = vmatprep.subr.mxu0 0.0
  %119 = vmatpush1.msra.mxu0 0.0
  %120 = vmatprep.subr.mxu0 0.0
  %121 = vmatpush1.msra.mxu0 0.0
  %122 = vmatprep.subr.mxu0 0.0
  %123 = vmatpush1.msra.mxu0 0.0
  %124 = vmatprep.subr.mxu0 0.0
  %125 = vmatpush1.msra.mxu0 0.0
  %126 = vmatprep.subr.mxu0 0.0
  %127 = vmatpush1.msra.mxu0 0.0
  %128 = vmatprep.subr.mxu0 0.0
  %129 = vmatpush1.msra.mxu0 0.0
  %130 = vmatprep.subr.mxu0 0.0
  %131 = vmatpush1.msra.mxu0 0.0
  %132 = vmatprep.subr.mxu0 0.0
  %133 = vmatpush1.msra.mxu0 0.0
  %134 = vmatprep.subr.mxu0 0.0
  %135 = vmatpush1.msra.mxu0 0.0
  %136 = vmatprep.subr.mxu0 0.0
  %137 = vmatpush1.msra.mxu0 0.0
  %138 = vmatprep.subr.mxu0 0.0
  %139 = vmatpush1.msra.mxu0 0.0
  %140 = vmatprep.subr.mxu0 0.0
  %141 = vmatpush1.msra.mxu0 0.0
  %142 = vmatprep.subr.mxu0 0.0
  %143 = vmatpush1.msra.mxu0 0.0
  %144 = vmatprep.subr.mxu0 0.0
  %145 = vmatpush1.msra.mxu0 0.0
  %146 = vmatprep.subr.mxu0 0.0
  %147 = vmatpush1.msra.mxu0 0.0
  %148 = vmatprep.subr.mxu0 0.0
  %149 = vmatpush1.msra.mxu0 0.0
  %150 = vmatprep.subr.mxu0 0.0
  %151 = vmatpush1.msra.mxu0 0.0
  %152 = vmatprep.subr.mxu0 0.0
  %153 = vmatpush1.msra.mxu0 0.0
  %154 = vmatprep.subr.mxu0 0.0
  %155 = vmatpush1.msra.mxu0 0.0
  %156 = vmatprep.subr.mxu0 0.0
  %157 = vmatpush1.msra.mxu0 0.0
  %158 = vmatprep.subr.mxu0 0.0
  %159 = vmatpush1.msra.mxu0 0.0
  %160 = vmatprep.subr.mxu0 0.0
  %161 = vmatpush1.msra.mxu0 0.0
  %162 = vmatprep.subr.mxu0 0.0
  %163 = vmatpush1.msra.mxu0 0.0
  %164 = vmatprep.subr.mxu0 0.0
  %165 = vmatpush1.msra.mxu0 0.0
  %166 = vmatprep.subr.mxu0 0.0
  %167 = vmatpush1.msra.mxu0 0.0
  %168 = vmatprep.subr.mxu0 0.0
  %169 = vmatpush1.msra.mxu0 0.0
  %170 = vmatprep.subr.mxu0 0.0
  %171 = vmatpush1.msra.mxu0 0.0
  %172 = vmatprep.subr.mxu0 0.0
  %173 = vmatpush1.msra.mxu0 0.0
  %174 = vmatprep.mubr.f32.mxu0 0.0
  %175 = vmatmul.mubr.f32.gmra.mrb[0].mxu0 %v108
  %v176 = vpop.f32.mrb[0].mxu0
  %v177 = vadd.f32 %v106, %v176
  %v178 = vpop.f32.mrb[0].mxu0
  %179 = vdwg.mxu0
  %v180 = vtanh.pop %v177
  %s181 = scalar_lea.vmem %s0, 4
  %v182 = vld [vmem:[%s181] sm:$0x3]
  %v184 = vsel %vm31, %v180, 0
  %186 = vmatprep.subr.mxu0 0.0
  %187 = vmatpush1.msra.mxu0 %v26
  %188 = vmatprep.subr.mxu0 0.0
  %189 = vmatpush1.msra.mxu0 %v27
  %190 = vmatprep.subr.mxu0 0.0
  %191 = vmatpush1.msra.mxu0 %v28
  %192 = vmatprep.subr.mxu0 0.0
  %193 = vmatpush1.msra.mxu0 %v29
  %194 = vmatprep.subr.mxu0 0.0
  %195 = vmatpush1.msra.mxu0 0.0
  %196 = vmatprep.subr.mxu0 0.0
  %197 = vmatpush1.msra.mxu0 0.0
  %198 = vmatprep.subr.mxu0 0.0
  %199 = vmatpush1.msra.mxu0 0.0
  %200 = vmatprep.subr.mxu0 0.0
  %201 = vmatpush1.msra.mxu0 0.0
  %202 = vmatprep.subr.mxu0 0.0
  %203 = vmatpush1.msra.mxu0 0.0
  %204 = vmatprep.subr.mxu0 0.0
  %205 = vmatpush1.msra.mxu0 0.0
  %206 = vmatprep.subr.mxu0 0.0
  %207 = vmatpush1.msra.mxu0 0.0
  %208 = vmatprep.subr.mxu0 0.0
  %209 = vmatpush1.msra.mxu0 0.0
  %210 = vmatprep.subr.mxu0 0.0
  %211 = vmatpush1.msra.mxu0 0.0
  %212 = vmatprep.subr.mxu0 0.0
  %213 = vmatpush1.msra.mxu0 0.0
  %214 = vmatprep.subr.mxu0 0.0
  %215 = vmatpush1.msra.mxu0 0.0
  %216 = vmatprep.subr.mxu0 0.0
  %217 = vmatpush1.msra.mxu0 0.0
  %218 = vmatprep.subr.mxu0 0.0
  %219 = vmatpush1.msra.mxu0 0.0
  %220 = vmatprep.subr.mxu0 0.0
  %221 = vmatpush1.msra.mxu0 0.0
  %222 = vmatprep.subr.mxu0 0.0
  %223 = vmatpush1.msra.mxu0 0.0
  %224 = vmatprep.subr.mxu0 0.0
  %225 = vmatpush1.msra.mxu0 0.0
  %226 = vmatprep.subr.mxu0 0.0
  %227 = vmatpush1.msra.mxu0 0.0
  %228 = vmatprep.subr.mxu0 0.0
  %229 = vmatpush1.msra.mxu0 0.0
  %230 = vmatprep.subr.mxu0 0.0
  %231 = vmatpush1.msra.mxu0 0.0
  %232 = vmatprep.subr.mxu0 0.0
  %233 = vmatpush1.msra.mxu0 0.0
  %234 = vmatprep.subr.mxu0 0.0
  %235 = vmatpush1.msra.mxu0 0.0
  %236 = vmatprep.subr.mxu0 0.0
  %237 = vmatpush1.msra.mxu0 0.0
  %238 = vmatprep.subr.mxu0 0.0
  %239 = vmatpush1.msra.mxu0 0.0
  %240 = vmatprep.subr.mxu0 0.0
  %241 = vmatpush1.msra.mxu0 0.0
  %242 = vmatprep.subr.mxu0 0.0
  %243 = vmatpush1.msra.mxu0 0.0
  %244 = vmatprep.subr.mxu0 0.0
  %245 = vmatpush1.msra.mxu0 0.0
  %246 = vmatprep.subr.mxu0 0.0
  %247 = vmatpush1.msra.mxu0 0.0
  %248 = vmatprep.subr.mxu0 0.0
  %249 = vmatpush1.msra.mxu0 0.0
  %250 = vmatprep.mubr.f32.mxu0 0.0
  %251 = vmatmul.mubr.f32.gmra.mrb[0].mxu0 %v184
  %v252 = vpop.f32.mrb[0].mxu0
  %v253 = vadd.f32 %v182, %v252
  %v254 = vpop.f32.mrb[0].mxu0
  %255 = vdwg.mxu0
  %v256 = vtanh.pop %v253
  %s257 = scalar_lea.vmem %s0, 6
  %v258 = vld [vmem:[%s257] sm:$0x3]
  %v260 = vsel %vm31, %v256, 0
  %262 = vmatprep.subr.mxu0 0.0
  %263 = vmatpush1.msra.mxu0 %v26
  %264 = vmatprep.subr.mxu0 0.0
  %265 = vmatpush1.msra.mxu0 %v27
  %266 = vmatprep.subr.mxu0 0.0
  %267 = vmatpush1.msra.mxu0 %v28
  %268 = vmatprep.subr.mxu0 0.0
  %269 = vmatpush1.msra.mxu0 %v29
  %270 = vmatprep.subr.mxu0 0.0
  %271 = vmatpush1.msra.mxu0 0.0
  %272 = vmatprep.subr.mxu0 0.0
  %273 = vmatpush1.msra.mxu0 0.0
  %274 = vmatprep.subr.mxu0 0.0
  %275 = vmatpush1.msra.mxu0 0.0
  %276 = vmatprep.subr.mxu0 0.0
  %277 = vmatpush1.msra.mxu0 0.0
  %278 = vmatprep.subr.mxu0 0.0
  %279 = vmatpush1.msra.mxu0 0.0
  %280 = vmatprep.subr.mxu0 0.0
  %281 = vmatpush1.msra.mxu0 0.0
  %282 = vmatprep.subr.mxu0 0.0
  %283 = vmatpush1.msra.mxu0 0.0
  %284 = vmatprep.subr.mxu0 0.0
  %285 = vmatpush1.msra.mxu0 0.0
  %286 = vmatprep.subr.mxu0 0.0
  %287 = vmatpush1.msra.mxu0 0.0
  %288 = vmatprep.subr.mxu0 0.0
  %289 = vmatpush1.msra.mxu0 0.0
  %290 = vmatprep.subr.mxu0 0.0
  %291 = vmatpush1.msra.mxu0 0.0
  %292 = vmatprep.subr.mxu0 0.0
  %293 = vmatpush1.msra.mxu0 0.0
  %294 = vmatprep.subr.mxu0 0.0
  %295 = vmatpush1.msra.mxu0 0.0
  %296 = vmatprep.subr.mxu0 0.0
  %297 = vmatpush1.msra.mxu0 0.0
  %298 = vmatprep.subr.mxu0 0.0
  %299 = vmatpush1.msra.mxu0 0.0
  %300 = vmatprep.subr.mxu0 0.0
  %301 = vmatpush1.msra.mxu0 0.0
  %302 = vmatprep.subr.mxu0 0.0
  %303 = vmatpush1.msra.mxu0 0.0
  %304 = vmatprep.subr.mxu0 0.0
  %305 = vmatpush1.msra.mxu0 0.0
  %306 = vmatprep.subr.mxu0 0.0
  %307 = vmatpush1.msra.mxu0 0.0
  %308 = vmatprep.subr.mxu0 0.0
  %309 = vmatpush1.msra.mxu0 0.0
  %310 = vmatprep.subr.mxu0 0.0
  %311 = vmatpush1.msra.mxu0 0.0
  %312 = vmatprep.subr.mxu0 0.0
  %313 = vmatpush1.msra.mxu0 0.0
  %314 = vmatprep.subr.mxu0 0.0
  %315 = vmatpush1.msra.mxu0 0.0
  %316 = vmatprep.subr.mxu0 0.0
  %317 = vmatpush1.msra.mxu0 0.0
  %318 = vmatprep.subr.mxu0 0.0
  %319 = vmatpush1.msra.mxu0 0.0
  %320 = vmatprep.subr.mxu0 0.0
  %321 = vmatpush1.msra.mxu0 0.0
  %322 = vmatprep.subr.mxu0 0.0
  %323 = vmatpush1.msra.mxu0 0.0
  %324 = vmatprep.subr.mxu0 0.0
  %325 = vmatpush1.msra.mxu0 0.0
  %326 = vmatprep.mubr.f32.mxu0 0.0
  %327 = vmatmul.mubr.f32.gmra.mrb[0].mxu0 %v260
  %v328 = vpop.f32.mrb[0].mxu0
  %v329 = vadd.f32 %v258, %v328
  %v330 = vpop.f32.mrb[0].mxu0
  %331 = vdwg.mxu0
  %v332 = vtanh.pop %v329
  %s333 = scalar_lea.vmem %s0, 8
  %v334 = vld [vmem:[%s333] sm:$0x3]
  %v336 = vsel %vm31, %v332, 0
  %338 = vmatprep.subr.mxu0 0.0
  %339 = vmatpush1.msra.mxu0 %v26
  %340 = vmatprep.subr.mxu0 0.0
  %341 = vmatpush1.msra.mxu0 %v27
  %342 = vmatprep.subr.mxu0 0.0
  %343 = vmatpush1.msra.mxu0 %v28
  %344 = vmatprep.subr.mxu0 0.0
  %345 = vmatpush1.msra.mxu0 %v29
  %346 = vmatprep.subr.mxu0 0.0
  %347 = vmatpush1.msra.mxu0 0.0
  %348 = vmatprep.subr.mxu0 0.0
  %349 = vmatpush1.msra.mxu0 0.0
  %350 = vmatprep.subr.mxu0 0.0
  %351 = vmatpush1.msra.mxu0 0.0
  %352 = vmatprep.subr.mxu0 0.0
  %353 = vmatpush1.msra.mxu0 0.0
  %354 = vmatprep.subr.mxu0 0.0
  %355 = vmatpush1.msra.mxu0 0.0
  %356 = vmatprep.subr.mxu0 0.0
  %357 = vmatpush1.msra.mxu0 0.0
  %358 = vmatprep.subr.mxu0 0.0
  %359 = vmatpush1.msra.mxu0 0.0
  %360 = vmatprep.subr.mxu0 0.0
  %361 = vmatpush1.msra.mxu0 0.0
  %362 = vmatprep.subr.mxu0 0.0
  %363 = vmatpush1.msra.mxu0 0.0
  %364 = vmatprep.subr.mxu0 0.0
  %365 = vmatpush1.msra.mxu0 0.0
  %366 = vmatprep.subr.mxu0 0.0
  %367 = vmatpush1.msra.mxu0 0.0
  %368 = vmatprep.subr.mxu0 0.0
  %369 = vmatpush1.msra.mxu0 0.0
  %370 = vmatprep.subr.mxu0 0.0
  %371 = vmatpush1.msra.mxu0 0.0
  %372 = vmatprep.subr.mxu0 0.0
  %373 = vmatpush1.msra.mxu0 0.0
  %374 = vmatprep.subr.mxu0 0.0
  %375 = vmatpush1.msra.mxu0 0.0
  %376 = vmatprep.subr.mxu0 0.0
  %377 = vmatpush1.msra.mxu0 0.0
  %378 = vmatprep.subr.mxu0 0.0
  %379 = vmatpush1.msra.mxu0 0.0
  %380 = vmatprep.subr.mxu0 0.0
  %381 = vmatpush1.msra.mxu0 0.0
  %382 = vmatprep.subr.mxu0 0.0
  %383 = vmatpush1.msra.mxu0 0.0
  %384 = vmatprep.subr.mxu0 0.0
  %385 = vmatpush1.msra.mxu0 0.0
  %386 = vmatprep.subr.mxu0 0.0
  %387 = vmatpush1.msra.mxu0 0.0
  %388 = vmatprep.subr.mxu0 0.0
  %389 = vmatpush1.msra.mxu0 0.0
  %390 = vmatprep.subr.mxu0 0.0
  %391 = vmatpush1.msra.mxu0 0.0
  %392 = vmatprep.subr.mxu0 0.0
  %393 = vmatpush1.msra.mxu0 0.0
  %394 = vmatprep.subr.mxu0 0.0
  %395 = vmatpush1.msra.mxu0 0.0
  %396 = vmatprep.subr.mxu0 0.0
  %397 = vmatpush1.msra.mxu0 0.0
  %398 = vmatprep.subr.mxu0 0.0
  %399 = vmatpush1.msra.mxu0 0.0
  %400 = vmatprep.subr.mxu0 0.0
  %401 = vmatpush1.msra.mxu0 0.0
  %402 = vmatprep.mubr.f32.mxu0 0.0
  %403 = vmatmul.mubr.f32.gmra.mrb[0].mxu0 %v336
  %v404 = vpop.f32.mrb[0].mxu0
  %v405 = vadd.f32 %v334, %v404
  %v406 = vpop.f32.mrb[0].mxu0
  %407 = vdwg.mxu0
  %v408 = vtanh.pop %v405
  %s409 = scalar_lea.vmem %s0, 10
  %v410 = vld [vmem:[%s409] sm:$0x3]
  %v412 = vsel %vm31, %v408, 0
  %414 = vmatprep.subr.mxu0 0.0
  %415 = vmatpush1.msra.mxu0 %v26
  %416 = vmatprep.subr.mxu0 0.0
  %417 = vmatpush1.msra.mxu0 %v27
  %418 = vmatprep.subr.mxu0 0.0
  %419 = vmatpush1.msra.mxu0 %v28
  %420 = vmatprep.subr.mxu0 0.0
  %421 = vmatpush1.msra.mxu0 %v29
  %422 = vmatprep.subr.mxu0 0.0
  %423 = vmatpush1.msra.mxu0 0.0
  %424 = vmatprep.subr.mxu0 0.0
  %425 = vmatpush1.msra.mxu0 0.0
  %426 = vmatprep.subr.mxu0 0.0
  %427 = vmatpush1.msra.mxu0 0.0
  %428 = vmatprep.subr.mxu0 0.0
  %429 = vmatpush1.msra.mxu0 0.0
  %430 = vmatprep.subr.mxu0 0.0
  %431 = vmatpush1.msra.mxu0 0.0
  %432 = vmatprep.subr.mxu0 0.0
  %433 = vmatpush1.msra.mxu0 0.0
  %434 = vmatprep.subr.mxu0 0.0
  %435 = vmatpush1.msra.mxu0 0.0
  %436 = vmatprep.subr.mxu0 0.0
  %437 = vmatpush1.msra.mxu0 0.0
  %438 = vmatprep.subr.mxu0 0.0
  %439 = vmatpush1.msra.mxu0 0.0
  %440 = vmatprep.subr.mxu0 0.0
  %441 = vmatpush1.msra.mxu0 0.0
  %442 = vmatprep.subr.mxu0 0.0
  %443 = vmatpush1.msra.mxu0 0.0
  %444 = vmatprep.subr.mxu0 0.0
  %445 = vmatpush1.msra.mxu0 0.0
  %446 = vmatprep.subr.mxu0 0.0
  %447 = vmatpush1.msra.mxu0 0.0
  %448 = vmatprep.subr.mxu0 0.0
  %449 = vmatpush1.msra.mxu0 0.0
  %450 = vmatprep.subr.mxu0 0.0
  %451 = vmatpush1.msra.mxu0 0.0
  %452 = vmatprep.subr.mxu0 0.0
  %453 = vmatpush1.msra.mxu0 0.0
  %454 = vmatprep.subr.mxu0 0.0
  %455 = vmatpush1.msra.mxu0 0.0
  %456 = vmatprep.subr.mxu0 0.0
  %457 = vmatpush1.msra.mxu0 0.0
  %458 = vmatprep.subr.mxu0 0.0
  %459 = vmatpush1.msra.mxu0 0.0
  %460 = vmatprep.subr.mxu0 0.0
  %461 = vmatpush1.msra.mxu0 0.0
  %462 = vmatprep.subr.mxu0 0.0
  %463 = vmatpush1.msra.mxu0 0.0
  %464 = vmatprep.subr.mxu0 0.0
  %465 = vmatpush1.msra.mxu0 0.0
  %466 = vmatprep.subr.mxu0 0.0
  %467 = vmatpush1.msra.mxu0 0.0
  %468 = vmatprep.subr.mxu0 0.0
  %469 = vmatpush1.msra.mxu0 0.0
  %470 = vmatprep.subr.mxu0 0.0
  %471 = vmatpush1.msra.mxu0 0.0
  %472 = vmatprep.subr.mxu0 0.0
  %473 = vmatpush1.msra.mxu0 0.0
  %474 = vmatprep.subr.mxu0 0.0
  %475 = vmatpush1.msra.mxu0 0.0
  %476 = vmatprep.subr.mxu0 0.0
  %477 = vmatpush1.msra.mxu0 0.0
  %478 = vmatprep.mubr.f32.mxu0 0.0
  %479 = vmatmul.mubr.f32.gmra.mrb[0].mxu0 %v412
  %v480 = vpop.f32.mrb[0].mxu0
  %v481 = vadd.f32 %v410, %v480
  %v482 = vpop.f32.mrb[0].mxu0
  %483 = vdwg.mxu0
  %v484 = vtanh.pop %v481
  %s485 = scalar_lea.vmem %s0, 12
  %v486 = vld [vmem:[%s485] sm:$0x3]
  %v488 = vsel %vm31, %v484, 0
  %490 = vmatprep.subr.mxu0 0.0
  %491 = vmatpush1.msra.mxu0 %v26
  %492 = vmatprep.subr.mxu0 0.0
  %493 = vmatpush1.msra.mxu0 %v27
  %494 = vmatprep.subr.mxu0 0.0
  %495 = vmatpush1.msra.mxu0 %v28
  %496 = vmatprep.subr.mxu0 0.0
  %497 = vmatpush1.msra.mxu0 %v29
  %498 = vmatprep.subr.mxu0 0.0
  %499 = vmatpush1.msra.mxu0 0.0
  %500 = vmatprep.subr.mxu0 0.0
  %501 = vmatpush1.msra.mxu0 0.0
  %502 = vmatprep.subr.mxu0 0.0
  %503 = vmatpush1.msra.mxu0 0.0
  %504 = vmatprep.subr.mxu0 0.0
  %505 = vmatpush1.msra.mxu0 0.0
  %506 = vmatprep.subr.mxu0 0.0
  %507 = vmatpush1.msra.mxu0 0.0
  %508 = vmatprep.subr.mxu0 0.0
  %509 = vmatpush1.msra.mxu0 0.0
  %510 = vmatprep.subr.mxu0 0.0
  %511 = vmatpush1.msra.mxu0 0.0
  %512 = vmatprep.subr.mxu0 0.0
  %513 = vmatpush1.msra.mxu0 0.0
  %514 = vmatprep.subr.mxu0 0.0
  %515 = vmatpush1.msra.mxu0 0.0
  %516 = vmatprep.subr.mxu0 0.0
  %517 = vmatpush1.msra.mxu0 0.0
  %518 = vmatprep.subr.mxu0 0.0
  %519 = vmatpush1.msra.mxu0 0.0
  %520 = vmatprep.subr.mxu0 0.0
  %521 = vmatpush1.msra.mxu0 0.0
  %522 = vmatprep.subr.mxu0 0.0
  %523 = vmatpush1.msra.mxu0 0.0
  %524 = vmatprep.subr.mxu0 0.0
  %525 = vmatpush1.msra.mxu0 0.0
  %526 = vmatprep.subr.mxu0 0.0
  %527 = vmatpush1.msra.mxu0 0.0
  %528 = vmatprep.subr.mxu0 0.0
  %529 = vmatpush1.msra.mxu0 0.0
  %530 = vmatprep.subr.mxu0 0.0
  %531 = vmatpush1.msra.mxu0 0.0
  %532 = vmatprep.subr.mxu0 0.0
  %533 = vmatpush1.msra.mxu0 0.0
  %534 = vmatprep.subr.mxu0 0.0
  %535 = vmatpush1.msra.mxu0 0.0
  %536 = vmatprep.subr.mxu0 0.0
  %537 = vmatpush1.msra.mxu0 0.0
  %538 = vmatprep.subr.mxu0 0.0
  %539 = vmatpush1.msra.mxu0 0.0
  %540 = vmatprep.subr.mxu0 0.0
  %541 = vmatpush1.msra.mxu0 0.0
  %542 = vmatprep.subr.mxu0 0.0
  %543 = vmatpush1.msra.mxu0 0.0
  %544 = vmatprep.subr.mxu0 0.0
  %545 = vmatpush1.msra.mxu0 0.0
  %546 = vmatprep.subr.mxu0 0.0
  %547 = vmatpush1.msra.mxu0 0.0
  %548 = vmatprep.subr.mxu0 0.0
  %549 = vmatpush1.msra.mxu0 0.0
  %550 = vmatprep.subr.mxu0 0.0
  %551 = vmatpush1.msra.mxu0 0.0
  %552 = vmatprep.subr.mxu0 0.0
  %553 = vmatpush1.msra.mxu0 0.0
  %554 = vmatprep.mubr.f32.mxu0 0.0
  %555 = vmatmul.mubr.f32.gmra.mrb[0].mxu0 %v488
  %v556 = vpop.f32.mrb[0].mxu0
  %v557 = vadd.f32 %v486, %v556
  %v558 = vpop.f32.mrb[0].mxu0
  %559 = vdwg.mxu0
  %v560 = vtanh.pop %v557
  %v561 = vrot.slane %v180, 6
  %v563 = vrot.slane %v256, 4
  %v565 = vrot.slane %v332, 2
  %v567 = vrot.slane %v484, 6
  %v570 = vrot.slane %v560, 4
  %vm572 = vcmask 1041408
  %v573 = vsel %vm572, %v104, %v561
  %vm574 = vcmask 1043456
  %v575 = vsel %vm574, %v573, %v563
  %vm576 = vcmask 1045504
  %v577 = vsel %vm576, %v575, %v565
  %v578 = vsel %vm572, %v408, %v567
  %v579 = vsel %vm574, %v578, %v570
  %v580 = vld [vmem:[%s3] sm:$0xff]
  %v581 = vld [vmem:[%s3 + $0x8] sm:$0xff]
  %v582 = vld [vmem:[%s3 + $0x10] sm:$0xff]
  %v583 = vld [vmem:[%s3 + $0x18] sm:$0xff]
  %v584 = vld [vmem:[%s4] sm:$0x1]
  %v586 = vlaneseq
  %v587 = vshrl.u32 %v586, 7
  %v588 = vsub.s32 0, %v587
  %v589 = vrot.slane %v584, %v588
  %v592 = vsel %vm31, %v577, 0
  %v595 = vsel %vm31, %v579, 0
  %597 = vmatprep.subr.mxu0 0.0
  %598 = vmatpush1.msra.mxu0 %v580
  %599 = vmatprep.subr.mxu0 0.0
  %600 = vmatpush1.msra.mxu0 %v581
  %601 = vmatprep.subr.mxu0 0.0
  %602 = vmatpush1.msra.mxu0 %v582
  %603 = vmatprep.subr.mxu0 0.0
  %604 = vmatpush1.msra.mxu0 %v583
  %605 = vmatprep.subr.mxu0 0.0
  %606 = vmatpush1.msra.mxu0 0.0
  %607 = vmatprep.subr.mxu0 0.0
  %608 = vmatpush1.msra.mxu0 0.0
  %609 = vmatprep.subr.mxu0 0.0
  %610 = vmatpush1.msra.mxu0 0.0
  %611 = vmatprep.subr.mxu0 0.0
  %612 = vmatpush1.msra.mxu0 0.0
  %613 = vmatprep.subr.mxu0 0.0
  %614 = vmatpush1.msra.mxu0 0.0
  %615 = vmatprep.subr.mxu0 0.0
  %616 = vmatpush1.msra.mxu0 0.0
  %617 = vmatprep.subr.mxu0 0.0
  %618 = vmatpush1.msra.mxu0 0.0
  %619 = vmatprep.subr.mxu0 0.0
  %620 = vmatpush1.msra.mxu0 0.0
  %621 = vmatprep.subr.mxu0 0.0
  %622 = vmatpush1.msra.mxu0 0.0
  %623 = vmatprep.subr.mxu0 0.0
  %624 = vmatpush1.msra.mxu0 0.0
  %625 = vmatprep.subr.mxu0 0.0
  %626 = vmatpush1.msra.mxu0 0.0
  %627 = vmatprep.subr.mxu0 0.0
  %628 = vmatpush1.msra.mxu0 0.0
  %629 = vmatprep.subr.mxu0 0.0
  %630 = vmatpush1.msra.mxu0 0.0
  %631 = vmatprep.subr.mxu0 0.0
  %632 = vmatpush1.msra.mxu0 0.0
  %633 = vmatprep.subr.mxu0 0.0
  %634 = vmatpush1.msra.mxu0 0.0
  %635 = vmatprep.subr.mxu0 0.0
  %636 = vmatpush1.msra.mxu0 0.0
  %637 = vmatprep.subr.mxu0 0.0
  %638 = vmatpush1.msra.mxu0 0.0
  %639 = vmatprep.subr.mxu0 0.0
  %640 = vmatpush1.msra.mxu0 0.0
  %641 = vmatprep.subr.mxu0 0.0
  %642 = vmatpush1.msra.mxu0 0.0
  %643 = vmatprep.subr.mxu0 0.0
  %644 = vmatpush1.msra.mxu0 0.0
  %645 = vmatprep.subr.mxu0 0.0
  %646 = vmatpush1.msra.mxu0 0.0
  %647 = vmatprep.subr.mxu0 0.0
  %648 = vmatpush1.msra.mxu0 0.0
  %649 = vmatprep.subr.mxu0 0.0
  %650 = vmatpush1.msra.mxu0 0.0
  %651 = vmatprep.subr.mxu0 0.0
  %652 = vmatpush1.msra.mxu0 0.0
  %653 = vmatprep.subr.mxu0 0.0
  %654 = vmatpush1.msra.mxu0 0.0
  %655 = vmatprep.subr.mxu0 0.0
  %656 = vmatpush1.msra.mxu0 0.0
  %657 = vmatprep.subr.mxu0 0.0
  %658 = vmatpush1.msra.mxu0 0.0
  %659 = vmatprep.subr.mxu0 0.0
  %660 = vmatpush1.msra.mxu0 0.0
  %661 = vmatprep.mubr.f32.mxu0 0.0
  %662 = vmatmul.mubr.f32.gmra.mrb[0].mxu0 %v592
  %v663 = vpop.f32.mrb[0].mxu0
  %v664 = vadd.f32 %v589, %v663
  %v665 = vpop.f32.mrb[0].mxu0
  %666 = vmatprep.mubr.f32.mxu0 0.0
  %667 = vmatmul.mubr.f32.gmra.mrb[0].mxu0 %v595
  %v668 = vpop.f32.mrb[0].mxu0
  %v669 = vadd.f32 %v589, %v668
  %v670 = vpop.f32.mrb[0].mxu0
  %671 = vdwg.mxu0
  %vm672 = vcmask 130048
  %673 = vst.msk [vmem:[%s5] sm:$0xff] %vm672, %v664
  %vm674 = vcmask 128000
  %675 = vst.msk [vmem:[%s5 + $0x8] sm:$0x3f] %vm674, %v669
  // Predicated region
  $region22: #{rnn_forward.1} parent=0 // pred_check
    _
  $region23: #{rnn_forward.1} parent=0 // pred_check_branch
    %677 = sbr.rel (0) target = $region25
  $region24: #{rnn_forward.1} parent=0 // pred_region
    _
  $region25: #{rnn_forward.1} parent=0 // pred_fallthru
    _
  // Predicated region
  $region26: #{rnn_forward.1} parent=0 // pred_check
    _
  $region27: #{rnn_forward.1} parent=0 // pred_check_branch
    %679 = sbr.rel (0) target = $region29
  $region28: #{rnn_forward.1} parent=0 // pred_region
    _
  $region29: #{rnn_forward.1} parent=0 // pred_fallthru
    _

</llo_original>
